<compile_context>
chip_gen: v6e
topology: v6e:2x2x1
jax: 0.10.0
libtpu: 0.0.40
codegen_flags: <defaults>
</compile_context>

<pallas_src>
import jax
import jax.numpy as jnp
from jax import lax
from jax.experimental import pallas as pl
from jax.experimental.pallas import tpu as pltpu

# lax.dot_general dims: contract last dim of lhs with last dim of rhs ("A @ B.T")
_NT_DIMS = (((1,), (1,)), ((), ()))

# Tile width along flattened B*N (the lane axis of the compute). Multiple of
# 128 for lane-dense stores; 512 is wide enough to hit ~85% of HBM BW per the
# Pallas tiling measurements while keeping each double-buffered x tile tiny
# (512 * D1 * 4 B), safe even under v5e's 16 MiB default scoped VMEM.
_TILE_BN = 512


def attention_label_kernel(x_ref, w_ref, b_ref, y_ref, out_ref):
    # x_ref  : (TBN, D1)  tile of flattened batch rows
    # w_ref  : (O, D1)    linear_1 weight, exactly as stored by nn.Linear
    # b_ref  : (O, 1)     linear_1 bias as a column
    # y_ref  : (M, O)     input_2, exactly as stored
    # out_ref: (1, TBN)   lane-dense argmax indices (int32)
    x = x_ref[...]                                              # (TBN, D1)

    # hT[o, r] = sum_d W1[o, d] * x[r, d] + b1[o]  ==  linear_1(input_1).T
    h_t = lax.dot_general(w_ref[...], x, _NT_DIMS,
                          preferred_element_type=jnp.float32)   # (O, TBN)
    h_t = h_t + b_ref[...]                                      # lane-broadcast bias

    # cT[m, r] = sum_o input_2[m, o] * hT[o, r]  ==  (h @ input_2.T).T
    c_t = jnp.dot(y_ref[...], h_t,
                  preferred_element_type=jnp.float32)           # (M, TBN)

    # argmax over M (sublane axis), first occurrence on ties (matches jnp.argmax).
    # Lives on VPU/XLU side slots that are idle under the MXU/DMA critical path.
    maxv = jnp.max(c_t, axis=0, keepdims=True)                  # (1, TBN)
    row_idx = lax.broadcasted_iota(jnp.int32, c_t.shape, 0)     # (M, TBN)
    big = jnp.int32(2 ** 30)                                    # sentinel; needs M < 2**30
    cand = jnp.where(c_t >= maxv, row_idx, big)
    out_ref[...] = jnp.min(cand, axis=0, keepdims=True)         # single (1, TBN) store


def attention_label(input_1, input_2, w1, b1, *, tile_bn=_TILE_BN):
    """input_1: (B, N, D1) f32; input_2: (M, O) f32; w1: (O, D1); b1: (O,)."""
    B, N, D1 = input_1.shape
    M, O = input_2.shape
    assert M < 2 ** 30, "argmax sentinel assumes M < 2**30"
    assert tile_bn % 128 == 0, "tile must be lane-dense (multiple of 128)"

    BN = B * N
    x2d = input_1.reshape(BN, D1)      # contiguous collapse -> free
    b_col = b1.reshape(O, 1)           # free

    if BN < tile_bn:
        # Tiny problem: single-shot, gridless (no per-step pipeline overhead).
        out = pl.pallas_call(
            attention_label_kernel,
            out_shape=jax.ShapeDtypeStruct((1, BN), jnp.int32),
            in_specs=[pl.BlockSpec(memory_space=pltpu.MemorySpace.VMEM)
                      for _ in range(4)],
            out_specs=pl.BlockSpec(memory_space=pltpu.MemorySpace.VMEM),
        )(x2d, w1, b_col, input_2)
    else:
        # HBM-bound regime: tile the B*N axis, double-buffered DMA pipelining,
        # weights/bias/input_2 stay resident (block index constant), grid axis
        # marked parallel so v7x's two TensorCores split the rows.
        grid = (pl.cdiv(BN, tile_bn),)  # partial last tile handled by Pallas masking
        out = pl.pallas_call(
            attention_label_kernel,
            out_shape=jax.ShapeDtypeStruct((1, BN), jnp.int32),
            grid_spec=pltpu.PrefetchScalarGridSpec(
                num_scalar_prefetch=0,
                grid=grid,
                in_specs=[
                    pl.BlockSpec((tile_bn, D1), lambda i: (i, 0)),   # x tiles
                    pl.BlockSpec((O, D1), lambda i: (0, 0)),         # W1 resident
                    pl.BlockSpec((O, 1), lambda i: (0, 0)),          # b1 resident
                    pl.BlockSpec((M, O), lambda i: (0, 0)),          # input_2 resident
                ],
                out_specs=pl.BlockSpec((1, tile_bn), lambda i: (0, i)),
            ),
            compiler_params=pltpu.CompilerParams(
                dimension_semantics=("parallel",),
            ),
        )(x2d, w1, b_col, input_2)
    return out.reshape(B, N)           # free


def attention_label_ref(input_1, input_2, w1, b1):
    h = jnp.einsum("bnd,od->bno", input_1, w1) + b1
    c = jnp.einsum("bno,mo->bnm", h, input_2)
    return jnp.argmax(c, axis=-1).astype(jnp.int32)


if __name__ == "__main__":
    # module hyper-params
    input_dim_1 = 32
    input_dim_2 = 24     # only used by linear_2, which the forward never calls
    output_dim = 16
    batch, N, M = 2, 8, 12

    key = jax.random.PRNGKey(0)
    k1, k2, k3, k4, k5 = jax.random.split(key, 5)

    # deterministic parameter init (nn.Linear(input_dim_1, output_dim))
    w1 = jax.random.normal(k1, (output_dim, input_dim_1), jnp.float32) * 0.1
    b1 = jax.random.normal(k2, (output_dim,), jnp.float32) * 0.1
    # TODO(synk): linear_2 (input_dim_2 -> output_dim) is unused in forward; not materialized.

    # example inputs (small shapes -> gridless path)
    input_1 = jax.random.normal(k3, (batch, N, input_dim_1), jnp.float32)
    input_2 = jax.random.normal(k4, (M, output_dim), jnp.float32)

    out = attention_label(input_1, input_2, w1, b1)
    out = jax.block_until_ready(out)
    ref = attention_label_ref(input_1, input_2, w1, b1)
    assert out.shape == (batch, N), out.shape
    assert bool(jnp.all(out == ref)), (out, ref)

    # second check: exercise the gridded, pipelined path (BN = 768 -> 2 tiles
    # of 512, including a masked partial tail tile).
    N_big = 384
    input_1_big = jax.random.normal(k5, (batch, N_big, input_dim_1), jnp.float32)
    out_big = attention_label(input_1_big, input_2, w1, b1)
    out_big = jax.block_until_ready(out_big)
    ref_big = attention_label_ref(input_1_big, input_2, w1, b1)
    assert out_big.shape == (batch, N_big), out_big.shape
    assert bool(jnp.all(out_big == ref_big))

    print("KERNEL_OK")
</pallas_src>

<mosaic_0001>
module attributes {stable_mosaic.version = 11 : i64} {
  func.func @attention_label_kernel(%arg0: memref<16x32xf32, #tpu.memory_space<vmem>>, %arg1: memref<16x32xf32, #tpu.memory_space<vmem>>, %arg2: memref<16x1xf32, #tpu.memory_space<vmem>>, %arg3: memref<12x16xf32, #tpu.memory_space<vmem>>, %arg4: memref<1x16xi32, #tpu.memory_space<vmem>>) attributes {dimension_semantics = [], scalar_prefetch = 0 : i64, scratch_operands = 0 : i64, tpu.core_type = #tpu.core_type<tc>} {
    %c0 = arith.constant 0 : index
    %c0_0 = arith.constant 0 : index
    %0 = vector.load %arg0[%c0, %c0_0] : memref<16x32xf32, #tpu.memory_space<vmem>>, vector<16x32xf32>
    %c0_1 = arith.constant 0 : index
    %c0_2 = arith.constant 0 : index
    %1 = vector.load %arg1[%c0_1, %c0_2] : memref<16x32xf32, #tpu.memory_space<vmem>>, vector<16x32xf32>
    %cst = arith.constant dense<0.000000e+00> : vector<16x16xf32>
    %2 = tpu.matmul %1, %0, %cst {dimension_numbers = #tpu.dot_dimension_numbers<[1], [1], [0], [0], [0, 0, 1, 0], [], []>} : vector<16x32xf32>, vector<16x32xf32>, vector<16x16xf32> -> vector<16x16xf32>
    %c0_3 = arith.constant 0 : index
    %c0_4 = arith.constant 0 : index
    %3 = vector.load %arg2[%c0_3, %c0_4] : memref<16x1xf32, #tpu.memory_space<vmem>>, vector<16x1xf32>
    %4 = vector.broadcast %3 : vector<16x1xf32> to vector<16x16xf32>
    %5 = arith.addf %2, %4 : vector<16x16xf32>
    %c0_5 = arith.constant 0 : index
    %c0_6 = arith.constant 0 : index
    %6 = vector.load %arg3[%c0_5, %c0_6] : memref<12x16xf32, #tpu.memory_space<vmem>>, vector<12x16xf32>
    %cst_7 = arith.constant dense<0.000000e+00> : vector<12x16xf32>
    %7 = tpu.matmul %6, %5, %cst_7 {dimension_numbers = #tpu.dot_dimension_numbers<[1], [0], [0], [1], [0, 0, 1, 1], [], []>} : vector<12x16xf32>, vector<16x16xf32>, vector<12x16xf32> -> vector<12x16xf32>
    %cst_8 = arith.constant dense<0xFF800000> : vector<16xf32>
    %8 = vector.multi_reduction <maximumf>, %7, %cst_8 [0] : vector<12x16xf32> to vector<16xf32>
    %9 = vector.shape_cast %8 : vector<16xf32> to vector<1x16xf32>
    %10 = tpu.iota {dimensions = array<i32: 0>} : vector<12x16xi32>
    %11 = vector.broadcast %9 : vector<1x16xf32> to vector<12x16xf32>
    %12 = arith.cmpf oge, %7, %11 : vector<12x16xf32>
    %c1073741824_i32 = arith.constant 1073741824 : i32
    %13 = vector.broadcast %c1073741824_i32 : i32 to vector<12x16xi32>
    %14 = arith.select %12, %10, %13 : vector<12x16xi1>, vector<12x16xi32>
    %cst_9 = arith.constant dense<2147483647> : vector<16xi32>
    %15 = vector.multi_reduction <minsi>, %14, %cst_9 [0] : vector<12x16xi32> to vector<16xi32>
    %16 = vector.shape_cast %15 : vector<16xi32> to vector<1x16xi32>
    %c0_10 = arith.constant 0 : index
    %c0_11 = arith.constant 0 : index
    %17 = vector.load %arg4[%c0_10, %c0_11] : memref<1x16xi32, #tpu.memory_space<vmem>>, vector<1x16xi32>
    tpu.vector_store %arg4[%c0_10, %c0_11], %16 {strides = array<i32>} : memref<1x16xi32, #tpu.memory_space<vmem>>, vector<1x16xi32>,
    return
  }
}

</mosaic_0001>

<llo_original>
// kernel: tpu_custom_call.1
$region0: #{tpu_custom_call.1}
  #allocation0 [shape = 'u32[]', space=smem, size = 0x4, offset = 0x4, fixed_abs, tag = 'smem constant byte address 0x4 - core index']
  #allocation1 [shape = 'u32[144,128]{1,0:T(1,128)}', space=vmem, size = 0x12000, scoped, tag = 'internal scratch']
  %s0 = inlined_call_operand.vmem [shape: f32[16,32], index: 0, kind: input, shape index: {}]
  %s1 = inlined_call_operand.hbm [shape: f32[16,32], index: 1, kind: input, shape index: {}]
  %s2 = inlined_call_operand.vmem [shape: f32[16,1], index: 2, kind: input, shape index: {}]
  %s3 = inlined_call_operand.hbm [shape: f32[12,16], index: 3, kind: input, shape index: {}]
  %s4 = inlined_call_operand.hbm [shape: s32[1,16], index: 4, kind: output, shape index: {}]
  %s5 = sld [smem:[#allocation0]]
  $region34: #{tpu_custom_call.1} parent=0
    _
  %s7 = ssub.s32 1, %s5
  %s8 = scalar_select 0, %s7, %s5
  $region1: #{tpu_custom_call.1} parent=0
    #allocation2 [shape = 'u8[8192]{0}', space=vmem, size = 0x2000, scoped, tag = 'input window, operand 1, single buffered']
    #allocation3 [shape = 's32[1]{0}', space=sflag, size = 0x4, scoped, tag = 'scoped memory for tpu_custom_call.1']
    #allocation4 [shape = 's32[1]{0}', space=sflag, size = 0x4, scoped, tag = 'scoped memory for tpu_custom_call.1']
    #allocation5 [shape = 'u8[8192]{0}', space=vmem, size = 0x2000, scoped, tag = 'input window, operand 3, single buffered']
    #allocation6 [shape = 's32[1]{0}', space=sflag, size = 0x4, scoped, tag = 'scoped memory for tpu_custom_call.1']
    #allocation7 [shape = 'u8[512]{0}', space=vmem, size = 0x400, scoped, tag = 'output window, operand 0, single buffered']
    %9 = vsyncpa [#allocation3], 0
    %10 = vsyncpa [#allocation6], 0
    %11 = vsyncpa [#allocation4], 0
    // Predicated region
    $region2: #{tpu_custom_call.1} parent=1 // pred_check
      _
    $region3: #{tpu_custom_call.1} parent=1 // pred_check_branch
      %13 = sbr.rel (0) target = $region5
    $region4: #{tpu_custom_call.1} parent=1 // pred_region
      _
    $region5: #{tpu_custom_call.1} parent=1 // pred_fallthru
      _
    // Predicated region
    $region6: #{tpu_custom_call.1} parent=1 // pred_check
      _
    $region7: #{tpu_custom_call.1} parent=1 // pred_check_branch
      %15 = sbr.rel (0) target = $region9
    $region8: #{tpu_custom_call.1} parent=1 // pred_region
      %s17 = ssub.s32 256, 256
      %18 = vsyncadd [#allocation3], %s17
      %s19 = sshll.u32 [#allocation2], 4
      %s20 = int_to_ptr.vmem [resolvable:$true] %s19
      %25 = dma.hbm_to_vmem [thread:$0]  %s1, 256, %s20, [#allocation3], 128, 128, 8
    $region9: #{tpu_custom_call.1} parent=1 // pred_fallthru
      _
    // Predicated region
    $region10: #{tpu_custom_call.1} parent=1 // pred_check
      _
    $region11: #{tpu_custom_call.1} parent=1 // pred_check_branch
      %27 = sbr.rel (0) target = $region13
    $region12: #{tpu_custom_call.1} parent=1 // pred_region
      _
    $region13: #{tpu_custom_call.1} parent=1 // pred_fallthru
      _
    // Predicated region
    $region14: #{tpu_custom_call.1} parent=1 // pred_check
      _
    $region15: #{tpu_custom_call.1} parent=1 // pred_check_branch
      %29 = sbr.rel (0) target = $region17
    $region16: #{tpu_custom_call.1} parent=1 // pred_region
      %s31 = ssub.s32 256, 256
      %32 = vsyncadd [#allocation6], %s31
      %s33 = sshll.u32 [#allocation5], 4
      %s34 = int_to_ptr.vmem [resolvable:$true] %s33
      %39 = dma.hbm_to_vmem [thread:$0]  %s3, 256, %s34, [#allocation6], 128, 128, 8
    $region17: #{tpu_custom_call.1} parent=1 // pred_fallthru
      _
    // Predicated region
    $region18: #{tpu_custom_call.1} parent=1 // pred_check
      _
    $region19: #{tpu_custom_call.1} parent=1 // pred_check_branch
      %41 = sbr.rel (0) target = $region21
    $region20: #{tpu_custom_call.1} parent=1 // pred_region
      %42 = dma.done [#allocation3], 256
    $region21: #{tpu_custom_call.1} parent=1 // pred_fallthru
      _
    // Predicated region
    $region22: #{tpu_custom_call.1} parent=1 // pred_check
      _
    $region23: #{tpu_custom_call.1} parent=1 // pred_check_branch
      %44 = sbr.rel (0) target = $region25
    $region24: #{tpu_custom_call.1} parent=1 // pred_region
      %45 = dma.done [#allocation6], 256
    $region25: #{tpu_custom_call.1} parent=1 // pred_fallthru
      _
    %v46 = vld [vmem:[%s0] sm:$0xff]
    %v47 = vld [vmem:[%s0 + $0x8] sm:$0xff]
    %v48 = vld [vmem:[#allocation2] sm:$0xff]
    %v49 = vld [vmem:[#allocation2 + $0x8] sm:$0xff]
    %v50 = vld [vmem:[%s2] sm:$0xff]
    %v51 = vld [vmem:[%s2 + $0x8] sm:$0xff]
    %53 = vset.pattern.permute.xlu0 0
    %54 = vperm.xlu0 %53, %v50
    %v55 = vpop.permute.xlu0 %54
    %58 = vset.pattern.permute.xlu0 0
    %59 = vperm.xlu0 %58, %v51
    %v60 = vpop.permute.xlu0 %59
    %vm62 = vcmask 261120
    %v64 = vsel %vm62, %v48, 0
    %v67 = vsel %vm62, %v49, 0
    %v70 = vsel %vm62, %v46, 0
    %v73 = vsel %vm62, %v47, 0
    %75 = vmatprep.subr.mxu0 0.0
    %76 = vmatpush1.xpose.msra.mxu0 0.0
    %77 = vmatprep.subr.mxu0 0.0
    %78 = vmatpush1.xpose.msra.mxu0 0.0
    %79 = vmatprep.subr.mxu0 0.0
    %80 = vmatpush1.xpose.msra.mxu0 0.0
    %81 = vmatprep.subr.mxu0 0.0
    %82 = vmatpush1.xpose.msra.mxu0 0.0
    %83 = vmatprep.subr.mxu0 0.0
    %84 = vmatpush1.xpose.msra.mxu0 0.0
    %85 = vmatprep.subr.mxu0 0.0
    %86 = vmatpush1.xpose.msra.mxu0 0.0
    %87 = vmatprep.subr.mxu0 0.0
    %88 = vmatpush1.xpose.msra.mxu0 0.0
    %89 = vmatprep.subr.mxu0 0.0
    %90 = vmatpush1.xpose.msra.mxu0 0.0
    %91 = vmatprep.subr.mxu0 0.0
    %92 = vmatpush1.xpose.msra.mxu0 0.0
    %93 = vmatprep.subr.mxu0 0.0
    %94 = vmatpush1.xpose.msra.mxu0 0.0
    %95 = vmatprep.subr.mxu0 0.0
    %96 = vmatpush1.xpose.msra.mxu0 0.0
    %97 = vmatprep.subr.mxu0 0.0
    %98 = vmatpush1.xpose.msra.mxu0 0.0
    %99 = vmatprep.subr.mxu0 0.0
    %100 = vmatpush1.xpose.msra.mxu0 0.0
    %101 = vmatprep.subr.mxu0 0.0
    %102 = vmatpush1.xpose.msra.mxu0 0.0
    %103 = vmatprep.subr.mxu0 0.0
    %104 = vmatpush1.xpose.msra.mxu0 %v73
    %105 = vmatprep.subr.mxu0 0.0
    %106 = vmatpush1.xpose.msra.mxu0 %v70
    %107 = vmatprep.subr.mxu0 0.0
    %108 = vmatpush2.xpose.msra.mxu0 0.0
    %109 = vmatprep.subr.mxu0 0.0
    %110 = vmatpush2.xpose.msra.mxu0 0.0
    %111 = vmatprep.subr.mxu0 0.0
    %112 = vmatpush2.xpose.msra.mxu0 0.0
    %113 = vmatprep.subr.mxu0 0.0
    %114 = vmatpush2.xpose.msra.mxu0 0.0
    %115 = vmatprep.subr.mxu0 0.0
    %116 = vmatpush2.xpose.msra.mxu0 0.0
    %117 = vmatprep.subr.mxu0 0.0
    %118 = vmatpush2.xpose.msra.mxu0 0.0
    %119 = vmatprep.subr.mxu0 0.0
    %120 = vmatpush2.xpose.msra.mxu0 0.0
    %121 = vmatprep.subr.mxu0 0.0
    %122 = vmatpush2.xpose.msra.mxu0 0.0
    %123 = vmatprep.subr.mxu0 0.0
    %124 = vmatpush2.xpose.msra.mxu0 0.0
    %125 = vmatprep.subr.mxu0 0.0
    %126 = vmatpush2.xpose.msra.mxu0 0.0
    %127 = vmatprep.subr.mxu0 0.0
    %128 = vmatpush2.xpose.msra.mxu0 0.0
    %129 = vmatprep.subr.mxu0 0.0
    %130 = vmatpush2.xpose.msra.mxu0 0.0
    %131 = vmatprep.subr.mxu0 0.0
    %132 = vmatpush2.xpose.msra.mxu0 0.0
    %133 = vmatprep.subr.mxu0 0.0
    %134 = vmatpush2.xpose.msra.mxu0 0.0
    %135 = vmatprep.subr.mxu0 0.0
    %136 = vmatpush2.xpose.msra.mxu0 0.0
    %137 = vmatprep.subr.mxu0 0.0
    %138 = vmatpush2.xpose.msra.mxu0 0.0
    %139 = vmatprep.mubr.f32.mxu0 0.0
    %140 = vmatmul.mubr.f32.gmra.mxu0 %v64
    %v141 = vpop.f32.mrf.mxu0
    %v142 = vadd.f32 %v55, %v141
    %v143 = vpop.f32.mrf.mxu0
    %144 = vmatprep.mubr.f32.mxu0 0.0
    %145 = vmatmul.mubr.f32.gmra.mxu0 %v67
    %v146 = vpop.f32.mrf.mxu0
    %v147 = vadd.f32 %v60, %v146
    %v148 = vpop.f32.mrf.mxu0
    %149 = vdwg.mxu0
    %v150 = vld [vmem:[#allocation5] sm:$0xff]
    %v151 = vld [vmem:[#allocation5 + $0x8] sm:$0xf]
    %vm152 = vcmask 130048
    %v154 = vsel %vm152, %v150, 0
    %v157 = vsel %vm152, %v151, 0
    %159 = vmatprep.subr.mxu0 0.0
    %160 = vmatpush1.msra.mxu0 0.0
    %161 = vmatprep.subr.mxu0 0.0
    %162 = vmatpush1.msra.mxu0 0.0
    %163 = vmatprep.subr.mxu0 0.0
    %164 = vmatpush1.msra.mxu0 0.0
    %165 = vmatprep.subr.mxu0 0.0
    %166 = vmatpush1.msra.mxu0 0.0
    %167 = vmatprep.subr.mxu0 0.0
    %168 = vmatpush1.msra.mxu0 0.0
    %169 = vmatprep.subr.mxu0 0.0
    %170 = vmatpush1.msra.mxu0 0.0
    %171 = vmatprep.subr.mxu0 0.0
    %172 = vmatpush1.msra.mxu0 0.0
    %173 = vmatprep.subr.mxu0 0.0
    %174 = vmatpush1.msra.mxu0 0.0
    %175 = vmatprep.subr.mxu0 0.0
    %176 = vmatpush1.msra.mxu0 0.0
    %177 = vmatprep.subr.mxu0 0.0
    %178 = vmatpush1.msra.mxu0 0.0
    %179 = vmatprep.subr.mxu0 0.0
    %180 = vmatpush1.msra.mxu0 0.0
    %181 = vmatprep.subr.mxu0 0.0
    %182 = vmatpush1.msra.mxu0 0.0
    %183 = vmatprep.subr.mxu0 0.0
    %184 = vmatpush1.msra.mxu0 0.0
    %185 = vmatprep.subr.mxu0 0.0
    %186 = vmatpush1.msra.mxu0 0.0
    %187 = vmatprep.subr.mxu0 0.0
    %188 = vmatpush1.msra.mxu0 %v147
    %189 = vmatprep.subr.mxu0 0.0
    %190 = vmatpush1.msra.mxu0 %v142
    %191 = vmatprep.subr.mxu0 0.0
    %192 = vmatpush2.msra.mxu0 0.0
    %193 = vmatprep.subr.mxu0 0.0
    %194 = vmatpush2.msra.mxu0 0.0
    %195 = vmatprep.subr.mxu0 0.0
    %196 = vmatpush2.msra.mxu0 0.0
    %197 = vmatprep.subr.mxu0 0.0
    %198 = vmatpush2.msra.mxu0 0.0
    %199 = vmatprep.subr.mxu0 0.0
    %200 = vmatpush2.msra.mxu0 0.0
    %201 = vmatprep.subr.mxu0 0.0
    %202 = vmatpush2.msra.mxu0 0.0
    %203 = vmatprep.subr.mxu0 0.0
    %204 = vmatpush2.msra.mxu0 0.0
    %205 = vmatprep.subr.mxu0 0.0
    %206 = vmatpush2.msra.mxu0 0.0
    %207 = vmatprep.subr.mxu0 0.0
    %208 = vmatpush2.msra.mxu0 0.0
    %209 = vmatprep.subr.mxu0 0.0
    %210 = vmatpush2.msra.mxu0 0.0
    %211 = vmatprep.subr.mxu0 0.0
    %212 = vmatpush2.msra.mxu0 0.0
    %213 = vmatprep.subr.mxu0 0.0
    %214 = vmatpush2.msra.mxu0 0.0
    %215 = vmatprep.subr.mxu0 0.0
    %216 = vmatpush2.msra.mxu0 0.0
    %217 = vmatprep.subr.mxu0 0.0
    %218 = vmatpush2.msra.mxu0 0.0
    %219 = vmatprep.subr.mxu0 0.0
    %220 = vmatpush2.msra.mxu0 0.0
    %221 = vmatprep.subr.mxu0 0.0
    %222 = vmatpush2.msra.mxu0 0.0
    %223 = vmatprep.mubr.f32.mxu0 0.0
    %224 = vmatmul.mubr.f32.gmra.mxu0 %v154
    %v225 = vpop.f32.mrf.mxu0
    %v226 = vadd.f32 0.0, %v225
    %v227 = vpop.f32.mrf.mxu0
    %228 = vmatprep.mubr.f32.mxu0 0.0
    %229 = vmatmul.mubr.f32.gmra.mxu0 %v157
    %v230 = vpop.f32.mrf.mxu0
    %v231 = vadd.f32 0.0, %v230
    %v232 = vpop.f32.mrf.mxu0
    %233 = vdwg.mxu0
    %v234 = vsel %vm152, %v226, -inf
    %vm235 = vcmask 125952
    %v236 = vsel %vm235, %v231, -inf
    %v237 = vmax.f32 %v234, %v236
    %v238 = vrot.slane %v237, 4
    %v239 = vmax.f32 %v237, %v238
    %v240 = vrot.slane %v239, 2
    %v241 = vmax.f32 %v239, %v240
    %v242 = vrot.slane %v241, 1
    %v243 = vmax.f32 %v241, %v242
    %v244 = vlaneseq
    %v245 = vshrl.u32 %v244, 7
    %v246 = vadd.s32 %v245, 8
    %vm247 = vcmp.ge.f32.partialorder %v226, %v243
    %vm248 = vcmp.ge.f32.partialorder %v231, %v243
    %v249 = vsel %vm247, %v245, 1073741824
    %v250 = vsel %vm248, %v246, 1073741824
    %v251 = vsel %vm152, %v249, 2147483647
    %v252 = vsel %vm235, %v250, 2147483647
    %vm253 = vcmp.lt.s32.totalorder %v251, %v252
    %v254 = vsel %vm253, %v251, %v252
    %v255 = vrot.slane %v254, 4
    %vm256 = vcmp.lt.s32.totalorder %v254, %v255
    %v257 = vsel %vm256, %v254, %v255
    %v258 = vrot.slane %v257, 2
    %vm259 = vcmp.lt.s32.totalorder %v257, %v258
    %v260 = vsel %vm259, %v257, %v258
    %v261 = vrot.slane %v260, 1
    %vm262 = vcmp.lt.s32.totalorder %v260, %v261
    %v263 = vsel %vm262, %v260, %v261
    %vm264 = vcmask 122880
    %265 = vst.msk [vmem:[#allocation7] sm:$0x1] %vm264, %v263
    // Predicated region
    $region26: #{tpu_custom_call.1} parent=1 // pred_check
      _
    $region27: #{tpu_custom_call.1} parent=1 // pred_check_branch
      %267 = sbr.rel (0) target = $region29
    $region28: #{tpu_custom_call.1} parent=1 // pred_region
      %s269 = ssub.s32 16, 16
      %270 = vsyncadd [#allocation4], %s269
      %s272 = sshll.u32 [#allocation7], 4
      %s273 = int_to_ptr.vmem [resolvable:$true] %s272
      %275 = dma.vmem_to_hbm [thread:$0]  %s273, 16, %s4, [#allocation4]
    $region29: #{tpu_custom_call.1} parent=1 // pred_fallthru
      _
    // Predicated region
    $region30: #{tpu_custom_call.1} parent=1 // pred_check
      _
    $region31: #{tpu_custom_call.1} parent=1 // pred_check_branch
      %277 = sbr.rel (0) target = $region33
    $region32: #{tpu_custom_call.1} parent=1 // pred_region
      %278 = dma.done [#allocation4], 16
    $region33: #{tpu_custom_call.1} parent=1 // pred_fallthru
      _
    %279 = vsyncpa [#allocation3], 1
    %280 = vsyncpa [#allocation6], 1
    %281 = vsyncpa [#allocation4], 1

</llo_original>
